<compile_context>
chip_gen: v5e
topology: v5e:2x2
jax: 0.10.0
libtpu: 0.0.40
codegen_flags: <defaults>
</compile_context>

<pallas_src>
import jax
import jax.numpy as jnp
from jax.experimental import pallas as pl
from jax.experimental.pallas import tpu as pltpu

_HEADROOM = 1.15  # compiler / internal scratch margin on the VMEM estimate


def _round_up(x, m):
    return ((x + m - 1) // m) * m


def _vmem_capacity_bytes():
    try:
        return int(pltpu.get_tpu_info().vmem_capacity_bytes)
    except Exception:
        return 64 * 1024 * 1024  # conservative fallback (v7x per-TC)


def _weight_block_bytes(d_in, th, d_out_p, in_bytes, w_bufs):
    # W1 (d_in, th) + W2 (th, d_out_p) in compute dtype, b1 (1, th) f32, all
    # with `w_bufs` pipeline buffers; b2 (1, d_out_p) f32 always single-buffered.
    return (w_bufs * ((d_in * th + th * d_out_p) * in_bytes + th * 4)
            + d_out_p * 4)


def _per_row_bytes(d_in, th, d_out_p, in_bytes):
    # Per batch-row VMEM: double-buffered f32 x tile + in-kernel bf16 x copy,
    # f32 h + bf16 h copy, f32 accumulator + f32 y before the store cast,
    # double-buffered f32 output tile.
    return (2 * d_in * 4
            + d_in * in_bytes
            + th * 4 + th * in_bytes
            + 2 * d_out_p * 4
            + 2 * d_out_p * 4)


def _pick_hidden_tile(d_in, hidden, d_out_p, in_bytes, budget):
    """Largest hidden tile that fits: fully resident if possible, else K-tiled."""
    hidden_full = _round_up(hidden, 128)
    candidates = [hidden_full] + [t for t in (4096, 2048, 1024, 512, 256, 128)
                                  if t < hidden_full]
    th = candidates[-1]
    for cand in candidates:
        w_bufs = 1 if cand == hidden_full else 2
        need = (_weight_block_bytes(d_in, cand, d_out_p, in_bytes, w_bufs)
                + 16 * _per_row_bytes(d_in, cand, d_out_p, in_bytes)) * _HEADROOM
        if need <= budget:
            th = cand
            break
    hidden_p = _round_up(hidden, th)
    return th, hidden_p, hidden_p // th


def _pick_bm(B, d_in, th, d_out_p, in_bytes, num_k, budget):
    w_bufs = 1 if num_k == 1 else 2
    row_bytes = _per_row_bytes(d_in, th, d_out_p, in_bytes)
    avail = budget / _HEADROOM - _weight_block_bytes(d_in, th, d_out_p, in_bytes, w_bufs)
    if B <= 32:
        bm = _round_up(max(B, 1), 16)          # bf16 sublane packing needs >=16
    else:
        bm = min(512, _round_up(pl.cdiv(B, 2), 16))
        steps = pl.cdiv(B, bm)
        if steps > 1 and steps % 2 == 1:       # v7x: even step count -> both TCs busy
            bm = _round_up(pl.cdiv(B, steps + 1), 16)
    while bm > 16 and bm * row_bytes > avail:
        bm = max(16, _round_up(bm // 2, 16))
    return bm


def _mlp_kernel(x_ref, w1_ref, b1_ref, w2_ref, b2_ref, o_ref, acc_ref):
    """relu(relu(x @ W1 + b1) @ W2 + b2), hidden dim tiled along grid axis 1."""
    k = pl.program_id(1)

    @pl.when(k == 0)
    def _():
        acc_ref[...] = jnp.zeros_like(acc_ref)

    # In-kernel f32 -> bf16 cast (cheap VPU op, hidden under MXU/DMA); avoids a
    # separate wrapper-side XLA cast pass over x.
    x = x_ref[...].astype(w1_ref.dtype)                              # (bm, d_in)
    h = jnp.dot(x, w1_ref[...], preferred_element_type=jnp.float32)  # (bm, th)
    h = jnp.maximum(h + b1_ref[...], 0.0)                            # layer1 ReLU
    acc_ref[...] += jnp.dot(h.astype(w2_ref.dtype), w2_ref[...],
                            preferred_element_type=jnp.float32)      # (bm, d_out_p)

    @pl.when(k == pl.num_programs(1) - 1)
    def _():
        o_ref[...] = jnp.maximum(acc_ref[...] + b2_ref[...], 0.0).astype(o_ref.dtype)


def prepare_params(w1, b1, w2, b2, *, compute_dtype=jnp.bfloat16):
    """Pad (lane-dense) and cast parameters ONCE; reuse across forward calls.

    w1: (input_dim, hidden_dim)   b1: (hidden_dim,)
    w2: (hidden_dim, output_dim)  b2: (output_dim,)
    """
    d_in, hidden = w1.shape
    d_out = w2.shape[1]
    in_bytes = jnp.dtype(compute_dtype).itemsize
    d_out_p = _round_up(d_out, 128)
    budget = int(_vmem_capacity_bytes() * 0.70)

    th, hidden_p, num_k = _pick_hidden_tile(d_in, hidden, d_out_p, in_bytes, budget)

    # NOTE: d_in (the first matmul's K dim) is intentionally left unpadded so x
    # is read straight from HBM with no extra pass; the MXU handles unaligned K.
    w1p = jnp.pad(w1, ((0, 0), (0, hidden_p - hidden))).astype(compute_dtype)
    w2p = jnp.pad(w2, ((0, hidden_p - hidden), (0, d_out_p - d_out))).astype(compute_dtype)
    b1p = jnp.pad(b1, (0, hidden_p - hidden)).reshape(1, hidden_p).astype(jnp.float32)
    b2p = jnp.pad(b2, (0, d_out_p - d_out)).reshape(1, d_out_p).astype(jnp.float32)

    meta = dict(d_in=d_in, hidden=hidden, d_out=d_out, th=th, hidden_p=hidden_p,
                d_out_p=d_out_p, num_k=num_k, in_bytes=in_bytes, budget=budget)
    return (w1p, b1p, w2p, b2p), meta


def hierarchical_feature_processor_prepared(x, params, meta):
    """Forward pass given pre-padded / pre-cast params from prepare_params."""
    w1p, b1p, w2p, b2p = params
    B, d_in = x.shape
    assert d_in == meta["d_in"]
    th, hidden_p, d_out_p = meta["th"], meta["hidden_p"], meta["d_out_p"]
    num_k, in_bytes = meta["num_k"], meta["in_bytes"]

    bm = _pick_bm(B, d_in, th, d_out_p, in_bytes, num_k, meta["budget"])
    grid = (pl.cdiv(B, bm), num_k)           # ragged last batch block is fine
    resident = (num_k == 1)
    vmem_limit = int(_vmem_capacity_bytes() * 0.80)

    def spec(shape, imap, single_buffer):
        if single_buffer:
            # Constant-index block: single-buffer it (Pallas otherwise keeps 2 copies).
            return pl.BlockSpec(shape, imap, pipeline_mode=pl.Buffered(1))
        return pl.BlockSpec(shape, imap)

    cost = pl.CostEstimate(
        flops=2 * B * (d_in * hidden_p + hidden_p * d_out_p),
        transcendentals=0,
        bytes_accessed=(B * d_in * 4
                        + (d_in * hidden_p + hidden_p * d_out_p) * in_bytes
                        + (hidden_p + d_out_p) * 4
                        + B * d_out_p * 4),
    )

    out = pl.pallas_call(
        _mlp_kernel,
        out_shape=jax.ShapeDtypeStruct((B, d_out_p), jnp.float32),
        grid_spec=pltpu.PrefetchScalarGridSpec(
            num_scalar_prefetch=0,
            grid=grid,
            in_specs=[
                pl.BlockSpec((bm, d_in), lambda i, k: (i, 0)),        # x (f32, cast in-kernel)
                spec((d_in, th), lambda i, k: (0, k), resident),      # W1 tile
                spec((1, th), lambda i, k: (0, k), resident),         # b1 tile
                spec((th, d_out_p), lambda i, k: (k, 0), resident),   # W2 tile
                spec((1, d_out_p), lambda i, k: (0, 0), True),        # b2 (always const)
            ],
            out_specs=pl.BlockSpec((bm, d_out_p), lambda i, k: (i, 0)),
            scratch_shapes=[pltpu.VMEM((bm, d_out_p), jnp.float32)],  # f32 accumulator
        ),
        compiler_params=pltpu.CompilerParams(
            dimension_semantics=("parallel", "arbitrary"),
            vmem_limit_bytes=vmem_limit,
        ),
        cost_estimate=cost,
    )(x, w1p, b1p, w2p, b2p)

    return out[:, :meta["d_out"]]


def hierarchical_feature_processor(x, w1, b1, w2, b2, *, compute_dtype=jnp.bfloat16):
    """Convenience one-shot wrapper (serving code should call prepare_params once)."""
    params, meta = prepare_params(w1, b1, w2, b2, compute_dtype=compute_dtype)
    return hierarchical_feature_processor_prepared(x, params, meta)


def reference_forward(x, w1, b1, w2, b2):
    h = jnp.maximum(x @ w1 + b1, 0.0)
    return jnp.maximum(h @ w2 + b2, 0.0)


if __name__ == "__main__":
    # Small shapes consistent with the module.
    batch, input_dim, hidden_dim, output_dim = 16, 32, 64, 16

    key = jax.random.PRNGKey(0)
    kx, kw1, kb1, kw2, kb2 = jax.random.split(key, 5)

    x = jax.random.normal(kx, (batch, input_dim), dtype=jnp.float32)

    # PyTorch nn.Linear stores (out, in); build the transposed (in, out) layout directly.
    w1 = jax.random.normal(kw1, (input_dim, hidden_dim), dtype=jnp.float32) * 0.1
    b1 = jax.random.normal(kb1, (hidden_dim,), dtype=jnp.float32) * 0.1
    w2 = jax.random.normal(kw2, (hidden_dim, output_dim), dtype=jnp.float32) * 0.1
    b2 = jax.random.normal(kb2, (output_dim,), dtype=jnp.float32) * 0.1

    # Pad / cast weights once (serving path), then run the fused kernel.
    params, meta = prepare_params(w1, b1, w2, b2)
    out = hierarchical_feature_processor_prepared(x, params, meta)
    out = jax.block_until_ready(out)

    ref = reference_forward(x, w1, b1, w2, b2)
    assert out.shape == (batch, output_dim)
    # bf16 operands / f32 accumulation => bf16-level tolerance vs f32 reference.
    assert jnp.allclose(out, ref, atol=2e-2, rtol=2e-2), "mismatch vs reference"

    print("KERNEL_OK")
</pallas_src>

<mosaic_0001>
module attributes {stable_mosaic.version = 11 : i64} {
  func.func @_mlp_kernel(%arg0: i32, %arg1: i32, %arg2: memref<16x32xf32, #tpu.memory_space<vmem>>, %arg3: memref<32x128xbf16, #tpu.memory_space<vmem>>, %arg4: memref<1x128xf32, #tpu.memory_space<vmem>>, %arg5: memref<128x128xbf16, #tpu.memory_space<vmem>>, %arg6: memref<1x128xf32, #tpu.memory_space<vmem>>, %arg7: memref<16x128xf32, #tpu.memory_space<vmem>>, %arg8: memref<16x128xf32, #tpu.memory_space<vmem>>) attributes {dimension_semantics = [#tpu.dimension_semantics<parallel>, #tpu.dimension_semantics<arbitrary>], iteration_bounds = array<i64: 1, 1>, scalar_prefetch = 0 : i64, scratch_operands = 1 : i64, tpu.core_type = #tpu.core_type<tc>, window_params = [{transform_indices = @transform_0, window_bounds = array<i64: 16, 32>}, {pipeline_mode = #tpu.pipeline_mode<synchronous>, transform_indices = @transform_1, window_bounds = array<i64: 32, 128>}, {pipeline_mode = #tpu.pipeline_mode<synchronous>, transform_indices = @transform_2, window_bounds = array<i64: 1, 128>}, {pipeline_mode = #tpu.pipeline_mode<synchronous>, transform_indices = @transform_3, window_bounds = array<i64: 128, 128>}, {pipeline_mode = #tpu.pipeline_mode<synchronous>, transform_indices = @transform_4, window_bounds = array<i64: 1, 128>}, {transform_indices = @transform_5, window_bounds = array<i64: 16, 128>}]} {
    %c0_i32 = arith.constant 0 : i32
    %0 = arith.cmpi eq, %arg1, %c0_i32 : i32
    %1 = arith.extui %0 : i1 to i32
    %c0_i32_0 = arith.constant 0 : i32
    %2 = arith.cmpi ne, %1, %c0_i32_0 : i32
    scf.if %2 {
      %cst_16 = arith.constant 0.000000e+00 : f32
      %21 = vector.broadcast %cst_16 : f32 to vector<16x128xf32>
      %c0_17 = arith.constant 0 : index
      %c0_18 = arith.constant 0 : index
      %22 = vector.load %arg8[%c0_17, %c0_18] : memref<16x128xf32, #tpu.memory_space<vmem>>, vector<16x128xf32>
      tpu.vector_store %arg8[%c0_17, %c0_18], %21 {strides = array<i32>} : memref<16x128xf32, #tpu.memory_space<vmem>>, vector<16x128xf32>,
    } else {
    }
    %c0 = arith.constant 0 : index
    %c0_1 = arith.constant 0 : index
    %3 = vector.load %arg2[%c0, %c0_1] : memref<16x32xf32, #tpu.memory_space<vmem>>, vector<16x32xf32>
    %4 = arith.truncf %3 : vector<16x32xf32> to vector<16x32xbf16>
    %c0_2 = arith.constant 0 : index
    %c0_3 = arith.constant 0 : index
    %5 = vector.load %arg3[%c0_2, %c0_3] : memref<32x128xbf16, #tpu.memory_space<vmem>>, vector<32x128xbf16>
    %cst = arith.constant dense<0.000000e+00> : vector<16x128xf32>
    %6 = tpu.matmul %4, %5, %cst {dimension_numbers = #tpu.dot_dimension_numbers<[1], [0], [0], [1], [0, 0, 1, 1], [], []>} : vector<16x32xbf16>, vector<32x128xbf16>, vector<16x128xf32> -> vector<16x128xf32>
    %c0_4 = arith.constant 0 : index
    %c0_5 = arith.constant 0 : index
    %7 = vector.load %arg4[%c0_4, %c0_5] : memref<1x128xf32, #tpu.memory_space<vmem>>, vector<1x128xf32>
    %8 = vector.broadcast %7 : vector<1x128xf32> to vector<16x128xf32>
    %9 = arith.addf %6, %8 : vector<16x128xf32>
    %cst_6 = arith.constant 0.000000e+00 : f32
    %10 = vector.broadcast %cst_6 : f32 to vector<16x128xf32>
    %11 = arith.maximumf %9, %10 : vector<16x128xf32>
    %c0_7 = arith.constant 0 : index
    %c0_8 = arith.constant 0 : index
    %12 = vector.load %arg8[%c0_7, %c0_8] : memref<16x128xf32, #tpu.memory_space<vmem>>, vector<16x128xf32>
    %13 = arith.truncf %11 : vector<16x128xf32> to vector<16x128xbf16>
    %c0_9 = arith.constant 0 : index
    %c0_10 = arith.constant 0 : index
    %14 = vector.load %arg5[%c0_9, %c0_10] : memref<128x128xbf16, #tpu.memory_space<vmem>>, vector<128x128xbf16>
    %cst_11 = arith.constant dense<0.000000e+00> : vector<16x128xf32>
    %15 = tpu.matmul %13, %14, %cst_11 {dimension_numbers = #tpu.dot_dimension_numbers<[1], [0], [0], [1], [0, 0, 1, 1], [], []>} : vector<16x128xbf16>, vector<128x128xbf16>, vector<16x128xf32> -> vector<16x128xf32>
    %16 = arith.addf %12, %15 : vector<16x128xf32>
    %c0_12 = arith.constant 0 : index
    %c0_13 = arith.constant 0 : index
    %17 = vector.load %arg8[%c0_12, %c0_13] : memref<16x128xf32, #tpu.memory_space<vmem>>, vector<16x128xf32>
    tpu.vector_store %arg8[%c0_12, %c0_13], %16 {strides = array<i32>} : memref<16x128xf32, #tpu.memory_space<vmem>>, vector<16x128xf32>,
    %c0_i32_14 = arith.constant 0 : i32
    %18 = arith.cmpi eq, %arg1, %c0_i32_14 : i32
    %19 = arith.extui %18 : i1 to i32
    %c0_i32_15 = arith.constant 0 : i32
    %20 = arith.cmpi ne, %19, %c0_i32_15 : i32
    scf.if %20 {
      %c0_16 = arith.constant 0 : index
      %c0_17 = arith.constant 0 : index
      %21 = vector.load %arg8[%c0_16, %c0_17] : memref<16x128xf32, #tpu.memory_space<vmem>>, vector<16x128xf32>
      %c0_18 = arith.constant 0 : index
      %c0_19 = arith.constant 0 : index
      %22 = vector.load %arg6[%c0_18, %c0_19] : memref<1x128xf32, #tpu.memory_space<vmem>>, vector<1x128xf32>
      %23 = vector.broadcast %22 : vector<1x128xf32> to vector<16x128xf32>
      %24 = arith.addf %21, %23 : vector<16x128xf32>
      %cst_20 = arith.constant 0.000000e+00 : f32
      %25 = vector.broadcast %cst_20 : f32 to vector<16x128xf32>
      %26 = arith.maximumf %24, %25 : vector<16x128xf32>
      %c0_21 = arith.constant 0 : index
      %c0_22 = arith.constant 0 : index
      %27 = vector.load %arg7[%c0_21, %c0_22] : memref<16x128xf32, #tpu.memory_space<vmem>>, vector<16x128xf32>
      tpu.vector_store %arg7[%c0_21, %c0_22], %26 {strides = array<i32>} : memref<16x128xf32, #tpu.memory_space<vmem>>, vector<16x128xf32>,
    } else {
    }
    return
  }
  func.func @transform_0(%arg0: i32, %arg1: i32) -> (i32, i32) {
    %c0_i32 = arith.constant 0 : i32
    %c0_i32_0 = arith.constant 0 : i32
    return %arg0, %c0_i32 : i32, i32
  }
  func.func @transform_1(%arg0: i32, %arg1: i32) -> (i32, i32) {
    %c0_i32 = arith.constant 0 : i32
    %c0_i32_0 = arith.constant 0 : i32
    return %c0_i32, %arg1 : i32, i32
  }
  func.func @transform_2(%arg0: i32, %arg1: i32) -> (i32, i32) {
    %c0_i32 = arith.constant 0 : i32
    %c0_i32_0 = arith.constant 0 : i32
    return %c0_i32, %arg1 : i32, i32
  }
  func.func @transform_3(%arg0: i32, %arg1: i32) -> (i32, i32) {
    %c0_i32 = arith.constant 0 : i32
    %c0_i32_0 = arith.constant 0 : i32
    return %arg1, %c0_i32 : i32, i32
  }
  func.func @transform_4(%arg0: i32, %arg1: i32) -> (i32, i32) {
    %c0_i32 = arith.constant 0 : i32
    %c0_i32_0 = arith.constant 0 : i32
    %c0_i32_1 = arith.constant 0 : i32
    return %c0_i32, %c0_i32_0 : i32, i32
  }
  func.func @transform_5(%arg0: i32, %arg1: i32) -> (i32, i32) {
    %c0_i32 = arith.constant 0 : i32
    %c0_i32_0 = arith.constant 0 : i32
    return %arg0, %c0_i32 : i32, i32
  }
}

</mosaic_0001>

<llo_original>
// kernel: tpu_custom_call.1
$region0: #{tpu_custom_call.1}
  #allocation0 [shape = 'u32[]', space=smem, size = 0x4, offset = 0x4, fixed_abs, tag = 'smem constant byte address 0x4 - core index']
  #allocation1 [shape = 'u32[72,128]{1,0:T(1,128)}', space=vmem, size = 0x9000, scoped, tag = 'internal scratch']
  #allocation2 [shape = 'f32[16,128]{1,0:T(8,128)}', space=vmem, size = 0x2000, scoped, tag = 'scratch operand']
  %s0 = inlined_call_operand.hbm [shape: f32[16,32], index: 0, kind: input, shape index: {}]
  %s1 = inlined_call_operand.hbm [shape: bf16[32,128], index: 1, kind: input, shape index: {}]
  %s2 = inlined_call_operand.vmem [shape: f32[1,128], index: 2, kind: input, shape index: {}]
  %s3 = inlined_call_operand.hbm [shape: bf16[128,128], index: 3, kind: input, shape index: {}]
  %s4 = inlined_call_operand.vmem [shape: f32[1,128], index: 4, kind: input, shape index: {}]
  %s5 = inlined_call_operand.hbm [shape: f32[16,128], index: 5, kind: output, shape index: {}]
  %s6 = sld [smem:[#allocation0]]
  $region50: #{tpu_custom_call.1} parent=0
    _
  %s8 = ssub.s32 1, %s6
  %s9 = scalar_select 0, %s8, %s6
  $region1: #{tpu_custom_call.1} parent=0
    #allocation3 [shape = 'u8[8192]{0}', space=vmem, size = 0x2000, scoped, tag = 'input window, operand 0, single buffered']
    #allocation4 [shape = 's32[1]{0}', space=sflag, size = 0x4, scoped, tag = 'scoped memory for tpu_custom_call.1']
    #allocation5 [shape = 's32[1]{0}', space=sflag, size = 0x4, scoped, tag = 'scoped memory for tpu_custom_call.1']
    #allocation6 [shape = 'u8[8192]{0}', space=vmem, size = 0x2000, scoped, tag = 'input window, operand 1, single buffered']
    #allocation7 [shape = 's32[1]{0}', space=sflag, size = 0x4, scoped, tag = 'scoped memory for tpu_custom_call.1']
    #allocation8 [shape = 'u8[32768]{0}', space=vmem, size = 0x8000, scoped, tag = 'input window, operand 3, single buffered']
    #allocation9 [shape = 'u8[8192]{0}', space=vmem, size = 0x2000, scoped, tag = 'output window, operand 0, single buffered']
    %10 = vsyncpa [#allocation4], 0
    %11 = vsyncpa [#allocation7], 0
    %12 = vsyncpa [#allocation5], 0
    // Predicated region
    $region2: #{tpu_custom_call.1} parent=1 // pred_check
      _
    $region3: #{tpu_custom_call.1} parent=1 // pred_check_branch
      %14 = sbr.rel (0) target = $region5
    $region4: #{tpu_custom_call.1} parent=1 // pred_region
      %16 = vsyncadd [#allocation4], 0
      %s17 = sshll.u32 %s0, 4
      %s18 = int_to_ptr.hbm [resolvable:$true] %s17
      %s19 = sshll.u32 [#allocation3], 4
      %s20 = int_to_ptr.vmem [resolvable:$true] %s19
      %25 = dma.hbm_to_vmem [thread:$0]  %s18, 256, %s20, [#allocation4], 128, 128, 8
    $region5: #{tpu_custom_call.1} parent=1 // pred_fallthru
      _
    // Predicated region
    $region6: #{tpu_custom_call.1} parent=1 // pred_check
      _
    $region7: #{tpu_custom_call.1} parent=1 // pred_check_branch
      %27 = sbr.rel (0) target = $region9
    $region8: #{tpu_custom_call.1} parent=1 // pred_region
      %29 = vsyncadd [#allocation7], 0
      %s30 = sshll.u32 %s1, 4
      %s31 = int_to_ptr.hbm [resolvable:$true] %s30
      %s32 = sshll.u32 [#allocation6], 4
      %s33 = int_to_ptr.vmem [resolvable:$true] %s32
      %38 = dma.hbm_to_vmem [thread:$0]  %s31, 256, %s33, [#allocation7], 64, 64, 4
    $region9: #{tpu_custom_call.1} parent=1 // pred_fallthru
      _
    // Predicated region
    $region10: #{tpu_custom_call.1} parent=1 // pred_check
      _
    $region11: #{tpu_custom_call.1} parent=1 // pred_check_branch
      %40 = sbr.rel (0) target = $region13
    $region12: #{tpu_custom_call.1} parent=1 // pred_region
      _
    $region13: #{tpu_custom_call.1} parent=1 // pred_fallthru
      _
    // Predicated region
    $region14: #{tpu_custom_call.1} parent=1 // pred_check
      _
    $region15: #{tpu_custom_call.1} parent=1 // pred_check_branch
      %42 = sbr.rel (0) target = $region17
    $region16: #{tpu_custom_call.1} parent=1 // pred_region
      %44 = vsyncadd [#allocation7], 0
      %s45 = sshll.u32 %s3, 4
      %s46 = int_to_ptr.hbm [resolvable:$true] %s45
      %s47 = sshll.u32 [#allocation8], 4
      %s48 = int_to_ptr.vmem [resolvable:$true] %s47
      %53 = dma.hbm_to_vmem [thread:$0]  %s46, 1024, %s48, [#allocation7], 64, 64, 4
    $region17: #{tpu_custom_call.1} parent=1 // pred_fallthru
      _
    // Predicated region
    $region18: #{tpu_custom_call.1} parent=1 // pred_check
      _
    $region19: #{tpu_custom_call.1} parent=1 // pred_check_branch
      %55 = sbr.rel (0) target = $region21
    $region20: #{tpu_custom_call.1} parent=1 // pred_region
      _
    $region21: #{tpu_custom_call.1} parent=1 // pred_fallthru
      _
    // Predicated region
    $region22: #{tpu_custom_call.1} parent=1 // pred_check
      _
    $region23: #{tpu_custom_call.1} parent=1 // pred_check_branch
      %57 = sbr.rel (0) target = $region25
    $region24: #{tpu_custom_call.1} parent=1 // pred_region
      %59 = dma.done [#allocation4], 256
    $region25: #{tpu_custom_call.1} parent=1 // pred_fallthru
      _
    // Predicated region
    $region26: #{tpu_custom_call.1} parent=1 // pred_check
      _
    $region27: #{tpu_custom_call.1} parent=1 // pred_check_branch
      %61 = sbr.rel (0) target = $region29
    $region28: #{tpu_custom_call.1} parent=1 // pred_region
      %63 = dma.done [#allocation7], 256
    $region29: #{tpu_custom_call.1} parent=1 // pred_fallthru
      _
    // Predicated region
    $region30: #{tpu_custom_call.1} parent=1 // pred_check
      _
    $region31: #{tpu_custom_call.1} parent=1 // pred_check_branch
      %65 = sbr.rel (0) target = $region33
    $region32: #{tpu_custom_call.1} parent=1 // pred_region
      %67 = dma.done [#allocation7], 1024
    $region33: #{tpu_custom_call.1} parent=1 // pred_fallthru
      _
    %p69 = scmp.eq.s32.totalorder 0, 0
    // Predicated region
    $region34: #{tpu_custom_call.1} parent=1 // pred_check
      %p70 = pneg %p69
    $region35: #{tpu_custom_call.1} parent=1 // pred_check_branch
      %72 = sbr.rel (%p70) target = $region37
    $region36: #{tpu_custom_call.1} parent=1 // pred_region
      %73 = vst [vmem:[#allocation2] sm:$0xff] 0.0
      %74 = vst [vmem:[#allocation2 + $0x8] sm:$0xff] 0.0
    $region37: #{tpu_custom_call.1} parent=1 // pred_fallthru
      _
    %v75 = vld [vmem:[#allocation3] sm:$0xff]
    %v76 = vld [vmem:[#allocation3 + $0x8] sm:$0xff]
    %v77 = vpack.c.bf16 %v76, %v75
    %v78 = vld [vmem:[#allocation6] sm:$0xf]
    %v79 = vld [vmem:[#allocation6 + $0x4] sm:$0xf]
    %v80 = vld [vmem:[#allocation6 + $0x8] sm:$0xf]
    %v81 = vld [vmem:[#allocation6 + $0xc] sm:$0xf]
    %v82 = vld [vmem:[%s2] sm:$0x1]
    %v84 = vperm.slane %v82, 0
    %v90 = vunpack.c.l.b16 %v78
    %v91 = vunpack.c.l.b16 %v79
    %v92 = vunpack.c.l.b16 %v80
    %v93 = vunpack.c.l.b16 %v81
    %v94 = vpack.c.b16 %v91, %v90
    %v95 = vpack.c.b16 %v93, %v92
    %vm98 = vcmask 261120
    %v100 = vsel %vm98, %v77, 0
    %102 = vmatpush.bf16.msra.mxu0 0
    %103 = vmatpush.bf16.msra.mxu0 0
    %104 = vmatpush.bf16.msra.mxu0 0
    %105 = vmatpush.bf16.msra.mxu0 0
    %106 = vmatpush.bf16.msra.mxu0 0
    %107 = vmatpush.bf16.msra.mxu0 0
    %108 = vmatpush.bf16.msra.mxu0 %v95
    %109 = vmatpush.bf16.msra.mxu0 %v94
    %110 = vmatmul.bf16.gmra.mxu0 %v100
    %v111 = vpop.f32.mrf.mxu0
    %v112 = vadd.f32 %v84, %v111
    %v113 = vpop.f32.mrf.mxu0
    %v114 = vadd.f32 %v84, %v113
    %115 = vdwg.mxu0
    %v116 = vmax.f32 %v112, 0.0
    %v117 = vmax.f32 %v114, 0.0
    %v118 = vld [vmem:[#allocation2] sm:$0xff]
    %v119 = vld [vmem:[#allocation2 + $0x8] sm:$0xff]
    %v120 = vpack.c.bf16 %v117, %v116
    %v121 = vld [vmem:[#allocation8] sm:$0xf]
    %v122 = vld [vmem:[#allocation8 + $0x4] sm:$0xf]
    %v123 = vld [vmem:[#allocation8 + $0x8] sm:$0xf]
    %v124 = vld [vmem:[#allocation8 + $0xc] sm:$0xf]
    %v125 = vld [vmem:[#allocation8 + $0x10] sm:$0xf]
    %v126 = vld [vmem:[#allocation8 + $0x14] sm:$0xf]
    %v127 = vld [vmem:[#allocation8 + $0x18] sm:$0xf]
    %v128 = vld [vmem:[#allocation8 + $0x1c] sm:$0xf]
    %v129 = vld [vmem:[#allocation8 + $0x20] sm:$0xf]
    %v130 = vld [vmem:[#allocation8 + $0x24] sm:$0xf]
    %v131 = vld [vmem:[#allocation8 + $0x28] sm:$0xf]
    %v132 = vld [vmem:[#allocation8 + $0x2c] sm:$0xf]
    %v133 = vld [vmem:[#allocation8 + $0x30] sm:$0xf]
    %v134 = vld [vmem:[#allocation8 + $0x34] sm:$0xf]
    %v135 = vld [vmem:[#allocation8 + $0x38] sm:$0xf]
    %v136 = vld [vmem:[#allocation8 + $0x3c] sm:$0xf]
    %v153 = vunpack.c.l.b16 %v121
    %v154 = vunpack.c.l.b16 %v122
    %v155 = vunpack.c.l.b16 %v123
    %v156 = vunpack.c.l.b16 %v124
    %v157 = vunpack.c.l.b16 %v125
    %v158 = vunpack.c.l.b16 %v126
    %v159 = vunpack.c.l.b16 %v127
    %v160 = vunpack.c.l.b16 %v128
    %v161 = vunpack.c.l.b16 %v129
    %v162 = vunpack.c.l.b16 %v130
    %v163 = vunpack.c.l.b16 %v131
    %v164 = vunpack.c.l.b16 %v132
    %v165 = vunpack.c.l.b16 %v133
    %v166 = vunpack.c.l.b16 %v134
    %v167 = vunpack.c.l.b16 %v135
    %v168 = vunpack.c.l.b16 %v136
    %v169 = vpack.c.b16 %v154, %v153
    %v170 = vpack.c.b16 %v156, %v155
    %v171 = vpack.c.b16 %v158, %v157
    %v172 = vpack.c.b16 %v160, %v159
    %v173 = vpack.c.b16 %v162, %v161
    %v174 = vpack.c.b16 %v164, %v163
    %v175 = vpack.c.b16 %v166, %v165
    %v176 = vpack.c.b16 %v168, %v167
    %185 = vmatpush.bf16.msra.mxu0 %v176
    %186 = vmatpush.bf16.msra.mxu0 %v175
    %187 = vmatpush.bf16.msra.mxu0 %v174
    %188 = vmatpush.bf16.msra.mxu0 %v173
    %189 = vmatpush.bf16.msra.mxu0 %v172
    %190 = vmatpush.bf16.msra.mxu0 %v171
    %191 = vmatpush.bf16.msra.mxu0 %v170
    %192 = vmatpush.bf16.msra.mxu0 %v169
    %193 = vmatmul.bf16.gmra.mxu0 %v120
    %v194 = vpop.f32.mrf.mxu0
    %v195 = vadd.f32 0.0, %v194
    %v196 = vpop.f32.mrf.mxu0
    %v197 = vadd.f32 0.0, %v196
    %198 = vdwg.mxu0
    %v199 = vadd.f32 %v118, %v195
    %v200 = vadd.f32 %v119, %v197
    %201 = vst [vmem:[#allocation2] sm:$0xff] %v199
    %202 = vst [vmem:[#allocation2 + $0x8] sm:$0xff] %v200
    // Predicated region
    $region38: #{tpu_custom_call.1} parent=1 // pred_check
      %p203 = pneg %p69
    $region39: #{tpu_custom_call.1} parent=1 // pred_check_branch
      %205 = sbr.rel (%p203) target = $region41
    $region40: #{tpu_custom_call.1} parent=1 // pred_region
      %v206 = vld [vmem:[#allocation2] sm:$0xff]
      %v207 = vld [vmem:[#allocation2 + $0x8] sm:$0xff]
      %v208 = vld [vmem:[%s4] sm:$0x1]
      %v210 = vperm.slane %v208, 0
      %v212 = vadd.f32 %v206, %v210
      %v213 = vadd.f32 %v207, %v210
      %v214 = vmax.f32 %v212, 0.0
      %v215 = vmax.f32 %v213, 0.0
      %216 = vst [vmem:[#allocation9] sm:$0xff] %v214
      %217 = vst [vmem:[#allocation9 + $0x8] sm:$0xff] %v215
    $region41: #{tpu_custom_call.1} parent=1 // pred_fallthru
      _
    // Predicated region
    $region42: #{tpu_custom_call.1} parent=1 // pred_check
      _
    $region43: #{tpu_custom_call.1} parent=1 // pred_check_branch
      %219 = sbr.rel (0) target = $region45
    $region44: #{tpu_custom_call.1} parent=1 // pred_region
      %221 = vsyncadd [#allocation5], 0
      %s222 = sshll.u32 [#allocation9], 4
      %s223 = int_to_ptr.vmem [resolvable:$true] %s222
      %s224 = sshll.u32 %s5, 4
      %s225 = int_to_ptr.hbm [resolvable:$true] %s224
      %230 = dma.vmem_to_hbm [thread:$0]  %s223, 256, %s225, [#allocation5], 128, 128, 8
    $region45: #{tpu_custom_call.1} parent=1 // pred_fallthru
      _
    // Predicated region
    $region46: #{tpu_custom_call.1} parent=1 // pred_check
      _
    $region47: #{tpu_custom_call.1} parent=1 // pred_check_branch
      %232 = sbr.rel (0) target = $region49
    $region48: #{tpu_custom_call.1} parent=1 // pred_region
      %234 = dma.done [#allocation5], 256
    $region49: #{tpu_custom_call.1} parent=1 // pred_fallthru
      _
    %235 = vsyncpa [#allocation4], 1
    %236 = vsyncpa [#allocation7], 1
    %237 = vsyncpa [#allocation5], 1

</llo_original>
